<compile_context>
chip_gen: v7x
topology: tpu7x:2x2x1
jax: 0.10.0
libtpu: 0.0.40
codegen_flags: <defaults>
</compile_context>

<pallas_src>
import math
from functools import partial

import jax
import jax.numpy as jnp
from jax.experimental import pallas as pl
from jax.experimental.pallas import tpu as pltpu

SHIFT = 1
REDUCE = 2
PAD = 0


def _round_up(x, m):
    return ((x + m - 1) // m) * m


# ---------------------------------------------------------------------------
# Leaf module kernel (tiled over rows):
#   gates = x @ W + b   with W = [Wc^T | Wo^T] (Ep, 2Hp),  b = [bc | bo]
#   c = gates[:, :Hp] ; h = sigmoid(gates[:, Hp:]) * tanh(c)
#   out = bundled [h | c]  written as two lane-aligned slab stores.
# ---------------------------------------------------------------------------
def _leaf_kernel(x_ref, w_ref, b_ref, out_ref):
    gates = (jnp.dot(x_ref[...], w_ref[...], preferred_element_type=jnp.float32)
             + b_ref[...])                                    # (TILE_N, 2Hp)
    hp = gates.shape[-1] // 2
    c = gates[:, :hp]
    o = jax.nn.sigmoid(gates[:, hp:])
    out_ref[:, 0:hp] = o * jnp.tanh(c)
    out_ref[:, hp:] = c


@partial(jax.jit, static_argnames=("tile_n",))
def leaf_module_pallas(x, w, b, *, tile_n):
    n, ep = x.shape
    two_hp = w.shape[1]
    hp = two_hp // 2
    grid = (n // tile_n,)
    return pl.pallas_call(
        _leaf_kernel,
        out_shape=jax.ShapeDtypeStruct((n, two_hp), jnp.float32),
        grid_spec=pltpu.PrefetchScalarGridSpec(
            num_scalar_prefetch=0,
            grid=grid,
            in_specs=[pl.BlockSpec((tile_n, ep), lambda i: (i, 0)),
                      pl.BlockSpec((ep, two_hp), lambda i: (0, 0)),
                      pl.BlockSpec((1, two_hp), lambda i: (0, 0))],
            out_specs=pl.BlockSpec((tile_n, two_hp), lambda i: (i, 0)),
        ),
        compiler_params=pltpu.CompilerParams(
            dimension_semantics=("parallel",),
            vmem_limit_bytes=32 * 1024 * 1024),
        cost_estimate=pl.CostEstimate(
            flops=int(2 * n * ep * two_hp),
            transcendentals=int(2 * n * hp),
            bytes_accessed=int(4 * (n * ep + ep * two_hp + n * two_hp))),
    )(x, w, b)


# ---------------------------------------------------------------------------
# Whole-schedule stack-machine REDUCE kernel.
#
# Grid = (num_reduce_steps,).  The [h|c] arena (n_rows, 2Hp) is the output
# block with a constant index map -> it lives in VMEM for the entire grid and
# is written back to HBM once at the end.  Step 0 initializes it from the leaf
# states.  Each step gathers m_pad left/right rows (indices from SMEM scalar
# prefetch), runs the fused composer (two dots on static weight halves), and
# scatters h / c back to the dest rows.  Padded slots read row 0 and write the
# trash row.
# ---------------------------------------------------------------------------
def _stack_kernel(lidx_ref, ridx_ref, didx_ref, leaf_ref, w_ref, b_ref,
                  arena_ref, *, n_leaf, hp, m_pad):
    s = pl.program_id(0)

    @pl.when(s == 0)
    def _init():
        arena_ref[...] = jnp.zeros_like(arena_ref)
        arena_ref[0:n_leaf, :] = leaf_ref[...]

    base = s * m_pad

    lrows, rrows = [], []
    for m in range(m_pad):                           # m_pad = batch (static)
        li = lidx_ref[base + m]
        ri = ridx_ref[base + m]
        lrows.append(arena_ref[pl.ds(li, 1), :])     # (1, 2Hp) bundled [lh|lc]
        rrows.append(arena_ref[pl.ds(ri, 1), :])
    left = jnp.concatenate(lrows, axis=0) if m_pad > 1 else lrows[0]
    right = jnp.concatenate(rrows, axis=0) if m_pad > 1 else rrows[0]

    lh, lc = left[:, :hp], left[:, hp:]
    rh, rc = right[:, :hp], right[:, hp:]
    gates = (jnp.dot(lh, w_ref[0:hp, :], preferred_element_type=jnp.float32)
             + jnp.dot(rh, w_ref[hp:, :], preferred_element_type=jnp.float32)
             + b_ref[...])                            # (m_pad, 4Hp)
    i_g = jax.nn.sigmoid(gates[:, 0 * hp:1 * hp])
    lf_g = jax.nn.sigmoid(gates[:, 1 * hp:2 * hp])
    rf_g = jax.nn.sigmoid(gates[:, 2 * hp:3 * hp])
    u_g = jnp.tanh(gates[:, 3 * hp:4 * hp])
    c = i_g * u_g + lf_g * lc + rf_g * rc
    h = jnp.tanh(c)

    for m in range(m_pad):
        di = didx_ref[base + m]
        arena_ref[pl.ds(di, 1), 0:hp] = h[m:m + 1, :]
        arena_ref[pl.ds(di, 1), hp:] = c[m:m + 1, :]


@partial(jax.jit, static_argnames=("n_rows", "m_pad"))
def stack_machine_pallas(lidx, ridx, didx, leaf, w, b, *, n_rows, m_pad):
    n_leaf, two_hp = leaf.shape
    hp = two_hp // 2
    four_hp = w.shape[1]
    n_steps = lidx.shape[0] // m_pad
    kernel = partial(_stack_kernel, n_leaf=n_leaf, hp=hp, m_pad=m_pad)
    return pl.pallas_call(
        kernel,
        out_shape=jax.ShapeDtypeStruct((n_rows, two_hp), jnp.float32),
        grid_spec=pltpu.PrefetchScalarGridSpec(
            num_scalar_prefetch=3,
            grid=(n_steps,),
            in_specs=[pl.BlockSpec((n_leaf, two_hp), lambda s, l, r, d: (0, 0)),
                      pl.BlockSpec((two_hp, four_hp), lambda s, l, r, d: (0, 0)),
                      pl.BlockSpec((1, four_hp), lambda s, l, r, d: (0, 0))],
            out_specs=pl.BlockSpec((n_rows, two_hp), lambda s, l, r, d: (0, 0)),
        ),
        compiler_params=pltpu.CompilerParams(
            dimension_semantics=("arbitrary",),
            vmem_limit_bytes=32 * 1024 * 1024),
        cost_estimate=pl.CostEstimate(
            flops=int(n_steps * 16 * m_pad * hp * hp),
            transcendentals=int(n_steps * 5 * m_pad * hp),
            bytes_accessed=int(4 * (two_hp * four_hp + n_leaf * two_hp
                                    + n_rows * two_hp))),
    )(lidx, ridx, didx, leaf, w, b)


# ---------------------------------------------------------------------------
# Parameter init (shapes / init ranges mirror torch.nn.Linear & nn.Embedding),
# with weights fused/transposed and zero-padded to lane-dense sizes at init.
# Pad columns provably stay zero through the leaf + composer math.
# ---------------------------------------------------------------------------
def _linear_params(key, out_features, in_features):
    stdv = 1.0 / math.sqrt(in_features)
    kw, kb = jax.random.split(key)
    w = jax.random.uniform(kw, (out_features, in_features), jnp.float32, -stdv, stdv)
    b = jax.random.uniform(kb, (out_features,), jnp.float32, -stdv, stdv)
    return w, b


def init_encoder_tree_lstm_params(key, vocab_size, emb_size, hidden_size):
    Ep = _round_up(emb_size, 128)
    Hp = _round_up(hidden_size, 128)
    keys = jax.random.split(key, 11)

    emb = jnp.zeros((vocab_size, Ep), jnp.float32)
    emb = emb.at[:, :emb_size].set(
        jax.random.normal(keys[0], (vocab_size, emb_size), jnp.float32))
    emb = emb.at[PAD].set(0.0)                                # padding_idx=PAD

    # ---- leaf module: cx, ox : Linear(E, H) fused -> (Ep, 2Hp) ----
    wc, bc = _linear_params(keys[1], hidden_size, emb_size)
    wo, bo = _linear_params(keys[2], hidden_size, emb_size)
    leaf_w = jnp.zeros((Ep, 2 * Hp), jnp.float32)
    leaf_w = leaf_w.at[:emb_size, 0:hidden_size].set(wc.T)
    leaf_w = leaf_w.at[:emb_size, Hp:Hp + hidden_size].set(wo.T)
    leaf_b = jnp.zeros((1, 2 * Hp), jnp.float32)
    leaf_b = leaf_b.at[0, 0:hidden_size].set(bc)
    leaf_b = leaf_b.at[0, Hp:Hp + hidden_size].set(bo)

    # ---- composer: 4 gates x (left, right) Linear(H, H); gate order [i,lf,rf,u]
    comp_w = jnp.zeros((2 * Hp, 4 * Hp), jnp.float32)
    comp_b = jnp.zeros((1, 4 * Hp), jnp.float32)
    for g in range(4):
        wl, bl = _linear_params(keys[3 + 2 * g], hidden_size, hidden_size)
        wr, br = _linear_params(keys[4 + 2 * g], hidden_size, hidden_size)
        comp_w = comp_w.at[0:hidden_size, g * Hp:g * Hp + hidden_size].set(wl.T)
        comp_w = comp_w.at[Hp:Hp + hidden_size, g * Hp:g * Hp + hidden_size].set(wr.T)
        comp_b = comp_b.at[0, g * Hp:g * Hp + hidden_size].set(bl + br)

    return dict(embedding=emb, leaf_w=leaf_w, leaf_b=leaf_b,
                comp_w=comp_w, comp_b=comp_b,
                emb_size=emb_size, emb_pad=Ep,
                hidden_size=hidden_size, hidden_pad=Hp)


# ---------------------------------------------------------------------------
# Forward pass of EncoderTreeLSTM.
# ---------------------------------------------------------------------------
def encoder_tree_lstm_forward(params, src_tokens, transitions):
    """src_tokens: (seqL, B) int32; transitions: host list (transL, B) of {1,2}.

    Returns (encoder_outputs, (h_states, c_states)) matching the reference:
      encoder_outputs : list (len B) of lists of (1, H) hidden states,
                        ordered tail-to-head (generate_outputs pops the stack)
      h_states, c_states : (B, H)
    """
    H = params['hidden_size']
    Hp = params['hidden_pad']
    seq_len, batch = src_tokens.shape

    # Leaf rows laid out (B, seqL): row(b, t) = b*seq_len + t (no activation
    # transpose; only the tiny token-id array is transposed).
    n_tok = seq_len * batch
    tile_n = 512 if n_tok >= 512 else _round_up(n_tok, 8)
    n_leaf = _round_up(n_tok, tile_n)
    tok = jnp.transpose(src_tokens).reshape(-1).astype(jnp.int32)
    if n_leaf > n_tok:
        tok = jnp.concatenate(
            [tok, jnp.full((n_leaf - n_tok,), PAD, jnp.int32)], axis=0)
    # TODO(synk): the embedding lookup is a pure gather; kept in XLA.
    embs = jnp.take(params['embedding'], tok, axis=0)             # (n_leaf, Ep)

    leaf = leaf_module_pallas(embs, params['leaf_w'], params['leaf_b'],
                              tile_n=tile_n)                      # (n_leaf, 2Hp)

    # Host-side simulation of the (static) shift/reduce schedule -> per-step
    # left/right/dest row-index tables for ONE scalar-prefetched pallas_call.
    buffers = [[b * seq_len + t for t in range(seq_len)] for b in range(batch)]
    stacks = [[] for _ in range(batch)]
    out_rows = [[] for _ in range(batch)]
    next_row = n_leaf
    steps = []
    for step in range(len(transitions)):
        trans = transitions[step]
        l_ids, r_ids, d_ids = [], [], []
        for b in range(batch):
            t = int(trans[b])
            if t == SHIFT:
                row = buffers[b].pop()            # tail-first, as in reference
                stacks[b].append(row)
                out_rows[b].append(row)
            elif t == REDUCE:
                right = stacks[b].pop()           # right popped first
                left = stacks[b].pop()
                dest = next_row
                next_row += 1
                stacks[b].append(dest)
                out_rows[b].append(dest)
                l_ids.append(left)
                r_ids.append(right)
                d_ids.append(dest)
        if d_ids:
            steps.append((l_ids, r_ids, d_ids))

    trash = next_row                              # scratch row for padded slots
    n_rows = next_row + 1
    m_pad = batch

    if steps:
        l_flat, r_flat, d_flat = [], [], []
        for l_ids, r_ids, d_ids in steps:
            pad = m_pad - len(d_ids)
            l_flat += l_ids + [0] * pad
            r_flat += r_ids + [0] * pad
            d_flat += d_ids + [trash] * pad
        lidx = jnp.asarray(l_flat, dtype=jnp.int32)
        ridx = jnp.asarray(r_flat, dtype=jnp.int32)
        didx = jnp.asarray(d_flat, dtype=jnp.int32)
        arena = stack_machine_pallas(lidx, ridx, didx, leaf,
                                     params['comp_w'], params['comp_b'],
                                     n_rows=n_rows, m_pad=m_pad)
    else:  # degenerate schedule with no REDUCE (seq_len == 1)
        arena = jnp.concatenate(
            [leaf, jnp.zeros((n_rows - n_leaf, 2 * Hp), jnp.float32)], axis=0)

    # generate_hidden_states
    for b in range(batch):
        assert len(stacks[b]) == 1
    root_rows = jnp.asarray([stacks[b][0] for b in range(batch)], jnp.int32)
    roots = jnp.take(arena, root_rows, axis=0)                    # (B, 2Hp)
    h_states = roots[:, :H]
    c_states = roots[:, Hp:Hp + H]

    # generate_outputs (tail to head) — one gather per batch element.
    outputs = []
    for b in range(batch):
        rows = jnp.asarray(list(reversed(out_rows[b])), jnp.int32)
        hs = jnp.take(arena, rows, axis=0)[:, :H]                 # (n_b, H)
        outputs.append([hs[i:i + 1] for i in range(hs.shape[0])])
    return outputs, (h_states, c_states)


if __name__ == "__main__":
    vocab_size = 50
    emb_size = 32
    hidden_size = 32
    seq_len = 4
    batch = 2

    key = jax.random.PRNGKey(0)
    k_params, k_tok = jax.random.split(key)
    params = init_encoder_tree_lstm_params(k_params, vocab_size, emb_size,
                                           hidden_size)

    src_tokens = jax.random.randint(k_tok, (seq_len, batch), 1, vocab_size,
                                    dtype=jnp.int32)

    # Valid shift/reduce schedules (2*seqL - 1 transitions per batch element):
    #   column 0 : S S R S R S R   (left-branching tree)
    #   column 1 : S S S S R R R   (right-branching tree)
    transitions = [
        [SHIFT, SHIFT],
        [SHIFT, SHIFT],
        [REDUCE, SHIFT],
        [SHIFT, SHIFT],
        [REDUCE, REDUCE],
        [SHIFT, REDUCE],
        [REDUCE, REDUCE],
    ]

    outputs, (h_states, c_states) = encoder_tree_lstm_forward(
        params, src_tokens, transitions)

    jax.block_until_ready((h_states, c_states, outputs))

    assert h_states.shape == (batch, hidden_size)
    assert c_states.shape == (batch, hidden_size)
    assert len(outputs) == batch
    assert all(len(out_b) == 2 * seq_len - 1 for out_b in outputs)
    assert all(h.shape == (1, hidden_size) for out_b in outputs for h in out_b)
    assert bool(jnp.all(jnp.isfinite(h_states)))
    assert bool(jnp.all(jnp.isfinite(c_states)))
    assert all(bool(jnp.all(jnp.isfinite(h))) for out_b in outputs for h in out_b)
    print("KERNEL_OK")
</pallas_src>

<mosaic_0001>
module attributes {stable_mosaic.version = 11 : i64} {
  func.func @_leaf_kernel(%arg0: i32, %arg1: memref<8x128xf32, #tpu.memory_space<vmem>>, %arg2: memref<128x256xf32, #tpu.memory_space<vmem>>, %arg3: memref<1x256xf32, #tpu.memory_space<vmem>>, %arg4: memref<8x256xf32, #tpu.memory_space<vmem>>) attributes {dimension_semantics = [#tpu.dimension_semantics<parallel>], iteration_bounds = array<i64: 1>, scalar_prefetch = 0 : i64, scratch_operands = 0 : i64, tpu.core_type = #tpu.core_type<tc>, window_params = [{transform_indices = @transform_0, window_bounds = array<i64: 8, 128>}, {pipeline_mode = #tpu.pipeline_mode<synchronous>, transform_indices = @transform_1, window_bounds = array<i64: 128, 256>}, {pipeline_mode = #tpu.pipeline_mode<synchronous>, transform_indices = @transform_2, window_bounds = array<i64: 1, 256>}, {transform_indices = @transform_3, window_bounds = array<i64: 8, 256>}]} {
    %c0 = arith.constant 0 : index
    %c0_0 = arith.constant 0 : index
    %0 = vector.load %arg1[%c0, %c0_0] : memref<8x128xf32, #tpu.memory_space<vmem>>, vector<8x128xf32>
    %c0_1 = arith.constant 0 : index
    %c0_2 = arith.constant 0 : index
    %1 = vector.load %arg2[%c0_1, %c0_2] : memref<128x256xf32, #tpu.memory_space<vmem>>, vector<128x256xf32>
    %cst = arith.constant dense<0.000000e+00> : vector<8x256xf32>
    %2 = tpu.matmul %0, %1, %cst {dimension_numbers = #tpu.dot_dimension_numbers<[1], [0], [0], [1], [0, 0, 1, 1], [], []>} : vector<8x128xf32>, vector<128x256xf32>, vector<8x256xf32> -> vector<8x256xf32>
    %c0_3 = arith.constant 0 : index
    %c0_4 = arith.constant 0 : index
    %3 = vector.load %arg3[%c0_3, %c0_4] : memref<1x256xf32, #tpu.memory_space<vmem>>, vector<1x256xf32>
    %4 = vector.broadcast %3 : vector<1x256xf32> to vector<8x256xf32>
    %5 = arith.addf %2, %4 : vector<8x256xf32>
    %6 = vector.extract_strided_slice %5 {offsets = [0, 0], sizes = [8, 128], strides = [1, 1]} : vector<8x256xf32> to vector<8x128xf32>
    %7 = vector.extract_strided_slice %5 {offsets = [0, 128], sizes = [8, 128], strides = [1, 1]} : vector<8x256xf32> to vector<8x128xf32>
    %8 = arith.negf %7 : vector<8x128xf32>
    %9 = math.exp %8 : vector<8x128xf32>
    %cst_5 = arith.constant 1.000000e+00 : f32
    %10 = vector.broadcast %cst_5 : f32 to vector<8x128xf32>
    %11 = arith.addf %10, %9 : vector<8x128xf32>
    %12 = arith.divf %10, %11 : vector<8x128xf32>
    %13 = math.tanh %6 : vector<8x128xf32>
    %14 = arith.mulf %12, %13 : vector<8x128xf32>
    %c0_6 = arith.constant 0 : index
    %c0_7 = arith.constant 0 : index
    %15 = vector.load %arg4[%c0_6, %c0_7] : memref<8x256xf32, #tpu.memory_space<vmem>>, vector<8x128xf32>
    tpu.vector_store %arg4[%c0_6, %c0_7], %14 {strides = array<i32>} : memref<8x256xf32, #tpu.memory_space<vmem>>, vector<8x128xf32>,
    %c0_8 = arith.constant 0 : index
    %c128 = arith.constant 128 : index
    %16 = vector.load %arg4[%c0_8, %c128] : memref<8x256xf32, #tpu.memory_space<vmem>>, vector<8x128xf32>
    tpu.vector_store %arg4[%c0_8, %c128], %6 {strides = array<i32>} : memref<8x256xf32, #tpu.memory_space<vmem>>, vector<8x128xf32>,
    return
  }
  func.func @transform_0(%arg0: i32) -> (i32, i32) {
    %c0_i32 = arith.constant 0 : i32
    %c0_i32_0 = arith.constant 0 : i32
    return %arg0, %c0_i32 : i32, i32
  }
  func.func @transform_1(%arg0: i32) -> (i32, i32) {
    %c0_i32 = arith.constant 0 : i32
    %c0_i32_0 = arith.constant 0 : i32
    %c0_i32_1 = arith.constant 0 : i32
    return %c0_i32, %c0_i32_0 : i32, i32
  }
  func.func @transform_2(%arg0: i32) -> (i32, i32) {
    %c0_i32 = arith.constant 0 : i32
    %c0_i32_0 = arith.constant 0 : i32
    %c0_i32_1 = arith.constant 0 : i32
    return %c0_i32, %c0_i32_0 : i32, i32
  }
  func.func @transform_3(%arg0: i32) -> (i32, i32) {
    %c0_i32 = arith.constant 0 : i32
    %c0_i32_0 = arith.constant 0 : i32
    return %arg0, %c0_i32 : i32, i32
  }
}

</mosaic_0001>

<llo_original>
// kernel: leaf_module_pallas.1
$region0: #{leaf_module_pallas.1}
  #allocation0 [shape = 'u32[]', space=smem, size = 0x4, offset = 0x4, fixed_abs, tag = 'smem constant byte address 0x4 - core index']
  #allocation1 [shape = 'u32[144,128]{1,0:T(1,128)}', space=vmem, size = 0x12000, scoped, tag = 'internal scratch']
  %s0 = inlined_call_operand.hbm [shape: f32[8,128], index: 0, kind: input, shape index: {}]
  %s1 = inlined_call_operand.hbm [shape: f32[128,256], index: 1, kind: input, shape index: {}]
  %s2 = inlined_call_operand.vmem [shape: f32[1,256], index: 2, kind: input, shape index: {}]
  %s3 = inlined_call_operand.hbm [shape: f32[8,256], index: 3, kind: output, shape index: {}]
  %s4 = sld [smem:[#allocation0]]
  $region30: #{leaf_module_pallas.1} parent=0
    _
  %s6 = ssub.s32 1, %s4
  %s7 = scalar_select 0, %s6, %s4
  $region1: #{leaf_module_pallas.1} parent=0
    #allocation2 [shape = 'u8[4096]{0}', space=vmem, size = 0x1000, scoped, tag = 'input window, operand 0, single buffered']
    #allocation3 [shape = 's32[1]{0}', space=sflag, size = 0x4, scoped, tag = 'scoped memory for leaf_module_pallas.1']
    #allocation4 [shape = 's32[1]{0}', space=sflag, size = 0x4, scoped, tag = 'scoped memory for leaf_module_pallas.1']
    #allocation5 [shape = 'u8[131072]{0}', space=vmem, size = 0x20000, scoped, tag = 'input window, operand 1, single buffered']
    #allocation6 [shape = 's32[1]{0}', space=sflag, size = 0x4, scoped, tag = 'scoped memory for leaf_module_pallas.1']
    #allocation7 [shape = 'u8[8192]{0}', space=vmem, size = 0x2000, scoped, tag = 'output window, operand 0, single buffered']
    %8 = vsyncpa [#allocation3], 0
    %9 = vsyncpa [#allocation6], 0
    %10 = vsyncpa [#allocation4], 0
    // Predicated region
    $region2: #{leaf_module_pallas.1} parent=1 // pred_check
      _
    $region3: #{leaf_module_pallas.1} parent=1 // pred_check_branch
      %12 = sbr.rel (0) target = $region5
    $region4: #{leaf_module_pallas.1} parent=1 // pred_region
      %s14 = ssub.s32 128, 128
      %15 = vsyncadd [#allocation3], %s14
      %s17 = sshll.u32 [#allocation2], 4
      %s18 = int_to_ptr.vmem [resolvable:$true] %s17
      %20 = dma.hbm_to_vmem [thread:$0]  %s0, 128, %s18, [#allocation3]
    $region5: #{leaf_module_pallas.1} parent=1 // pred_fallthru
      _
    // Predicated region
    $region6: #{leaf_module_pallas.1} parent=1 // pred_check
      _
    $region7: #{leaf_module_pallas.1} parent=1 // pred_check_branch
      %22 = sbr.rel (0) target = $region9
    $region8: #{leaf_module_pallas.1} parent=1 // pred_region
      %s24 = ssub.s32 4096, 4096
      %25 = vsyncadd [#allocation6], %s24
      %s26 = sshll.u32 [#allocation5], 4
      %s27 = int_to_ptr.vmem [resolvable:$true] %s26
      %32 = dma.hbm_to_vmem [thread:$0]  %s1, 4096, %s27, [#allocation6], 256, 256, 16
    $region9: #{leaf_module_pallas.1} parent=1 // pred_fallthru
      _
    // Predicated region
    $region10: #{leaf_module_pallas.1} parent=1 // pred_check
      _
    $region11: #{leaf_module_pallas.1} parent=1 // pred_check_branch
      %34 = sbr.rel (0) target = $region13
    $region12: #{leaf_module_pallas.1} parent=1 // pred_region
      _
    $region13: #{leaf_module_pallas.1} parent=1 // pred_fallthru
      _
    // Predicated region
    $region14: #{leaf_module_pallas.1} parent=1 // pred_check
      _
    $region15: #{leaf_module_pallas.1} parent=1 // pred_check_branch
      %36 = sbr.rel (0) target = $region17
    $region16: #{leaf_module_pallas.1} parent=1 // pred_region
      %37 = dma.done [#allocation3], 128
    $region17: #{leaf_module_pallas.1} parent=1 // pred_fallthru
      _
    // Predicated region
    $region18: #{leaf_module_pallas.1} parent=1 // pred_check
      _
    $region19: #{leaf_module_pallas.1} parent=1 // pred_check_branch
      %39 = sbr.rel (0) target = $region21
    $region20: #{leaf_module_pallas.1} parent=1 // pred_region
      %40 = dma.done [#allocation6], 4096
    $region21: #{leaf_module_pallas.1} parent=1 // pred_fallthru
      _
    %v41 = vld [vmem:[#allocation2] sm:$0xff]
    %v42 = vld [vmem:[#allocation5] sm:$0xff]
    %v43 = vld [vmem:[#allocation5 + $0x8] sm:$0xff]
    %v44 = vld [vmem:[#allocation5 + $0x10] sm:$0xff]
    %v45 = vld [vmem:[#allocation5 + $0x18] sm:$0xff]
    %v46 = vld [vmem:[#allocation5 + $0x20] sm:$0xff]
    %v47 = vld [vmem:[#allocation5 + $0x28] sm:$0xff]
    %v48 = vld [vmem:[#allocation5 + $0x30] sm:$0xff]
    %v49 = vld [vmem:[#allocation5 + $0x38] sm:$0xff]
    %v50 = vld [vmem:[#allocation5 + $0x40] sm:$0xff]
    %v51 = vld [vmem:[#allocation5 + $0x48] sm:$0xff]
    %v52 = vld [vmem:[#allocation5 + $0x50] sm:$0xff]
    %v53 = vld [vmem:[#allocation5 + $0x58] sm:$0xff]
    %v54 = vld [vmem:[#allocation5 + $0x60] sm:$0xff]
    %v55 = vld [vmem:[#allocation5 + $0x68] sm:$0xff]
    %v56 = vld [vmem:[#allocation5 + $0x70] sm:$0xff]
    %v57 = vld [vmem:[#allocation5 + $0x78] sm:$0xff]
    %v58 = vld [vmem:[#allocation5 + $0x80] sm:$0xff]
    %v59 = vld [vmem:[#allocation5 + $0x88] sm:$0xff]
    %v60 = vld [vmem:[#allocation5 + $0x90] sm:$0xff]
    %v61 = vld [vmem:[#allocation5 + $0x98] sm:$0xff]
    %v62 = vld [vmem:[#allocation5 + $0xa0] sm:$0xff]
    %v63 = vld [vmem:[#allocation5 + $0xa8] sm:$0xff]
    %v64 = vld [vmem:[#allocation5 + $0xb0] sm:$0xff]
    %v65 = vld [vmem:[#allocation5 + $0xb8] sm:$0xff]
    %v66 = vld [vmem:[#allocation5 + $0xc0] sm:$0xff]
    %v67 = vld [vmem:[#allocation5 + $0xc8] sm:$0xff]
    %v68 = vld [vmem:[#allocation5 + $0xd0] sm:$0xff]
    %v69 = vld [vmem:[#allocation5 + $0xd8] sm:$0xff]
    %v70 = vld [vmem:[#allocation5 + $0xe0] sm:$0xff]
    %v71 = vld [vmem:[#allocation5 + $0xe8] sm:$0xff]
    %v72 = vld [vmem:[#allocation5 + $0xf0] sm:$0xff]
    %v73 = vld [vmem:[#allocation5 + $0xf8] sm:$0xff]
    %v74 = vld [vmem:[%s2] sm:$0x3]
    %v76 = vlaneseq
    %v77 = vshrl.u32 %v76, 7
    %v78 = vsub.s32 0, %v77
    %v79 = vrot.slane %v74, %v78
    %v80 = vlaneseq
    %v81 = vshrl.u32 %v80, 7
    %v82 = vsub.s32 1, %v81
    %v83 = vrot.slane %v74, %v82
    %86 = vmatprep.subr.mxu0 %v43
    %87 = vmatpush1.msra.mxu0 %v42
    %88 = vmatprep.subr.mxu0 %v45
    %89 = vmatpush1.msra.mxu0 %v44
    %90 = vmatprep.subr.mxu0 %v47
    %91 = vmatpush1.msra.mxu0 %v46
    %92 = vmatprep.subr.mxu0 %v49
    %93 = vmatpush1.msra.mxu0 %v48
    %94 = vmatprep.subr.mxu0 %v51
    %95 = vmatpush1.msra.mxu0 %v50
    %96 = vmatprep.subr.mxu0 %v53
    %97 = vmatpush1.msra.mxu0 %v52
    %98 = vmatprep.subr.mxu0 %v55
    %99 = vmatpush1.msra.mxu0 %v54
    %100 = vmatprep.subr.mxu0 %v57
    %101 = vmatpush1.msra.mxu0 %v56
    %102 = vmatprep.subr.mxu0 %v59
    %103 = vmatpush1.msra.mxu0 %v58
    %104 = vmatprep.subr.mxu0 %v61
    %105 = vmatpush1.msra.mxu0 %v60
    %106 = vmatprep.subr.mxu0 %v63
    %107 = vmatpush1.msra.mxu0 %v62
    %108 = vmatprep.subr.mxu0 %v65
    %109 = vmatpush1.msra.mxu0 %v64
    %110 = vmatprep.subr.mxu0 %v67
    %111 = vmatpush1.msra.mxu0 %v66
    %112 = vmatprep.subr.mxu0 %v69
    %113 = vmatpush1.msra.mxu0 %v68
    %114 = vmatprep.subr.mxu0 %v71
    %115 = vmatpush1.msra.mxu0 %v70
    %116 = vmatprep.subr.mxu0 %v73
    %117 = vmatpush1.msra.mxu0 %v72
    %118 = vmatprep.subr.mxu0 0.0
    %119 = vmatpush1.msra.mxu0 0.0
    %120 = vmatprep.subr.mxu0 0.0
    %121 = vmatpush1.msra.mxu0 0.0
    %122 = vmatprep.subr.mxu0 0.0
    %123 = vmatpush1.msra.mxu0 0.0
    %124 = vmatprep.subr.mxu0 0.0
    %125 = vmatpush1.msra.mxu0 0.0
    %126 = vmatprep.subr.mxu0 0.0
    %127 = vmatpush1.msra.mxu0 0.0
    %128 = vmatprep.subr.mxu0 0.0
    %129 = vmatpush1.msra.mxu0 0.0
    %130 = vmatprep.subr.mxu0 0.0
    %131 = vmatpush1.msra.mxu0 0.0
    %132 = vmatprep.subr.mxu0 0.0
    %133 = vmatpush1.msra.mxu0 0.0
    %134 = vmatprep.subr.mxu0 0.0
    %135 = vmatpush1.msra.mxu0 0.0
    %136 = vmatprep.subr.mxu0 0.0
    %137 = vmatpush1.msra.mxu0 0.0
    %138 = vmatprep.subr.mxu0 0.0
    %139 = vmatpush1.msra.mxu0 0.0
    %140 = vmatprep.subr.mxu0 0.0
    %141 = vmatpush1.msra.mxu0 0.0
    %142 = vmatprep.subr.mxu0 0.0
    %143 = vmatpush1.msra.mxu0 0.0
    %144 = vmatprep.subr.mxu0 0.0
    %145 = vmatpush1.msra.mxu0 0.0
    %146 = vmatprep.subr.mxu0 0.0
    %147 = vmatpush1.msra.mxu0 0.0
    %148 = vmatprep.subr.mxu0 0.0
    %149 = vmatpush1.msra.mxu0 0.0
    %150 = vmatprep.mubr.f32.mxu0 0.0
    %151 = vmatmul.mubr.f32.gmra.mrb[0].mxu0 %v41
    %v152 = vpop.f32.mrb[0].mxu0
    %v153 = vadd.f32 %v79, %v152
    %v154 = vpop.f32.mrb[0].mxu0
    %v155 = vadd.f32 %v83, %v154
    %156 = vdwg.mxu0
    %v157 = vxor.u32 %v155, 2147483648
    %v158 = vmul.f32 %v157, 1.442695
    %v159 = vpow.pop %v158
    %v160 = vadd.f32 %v159, 1.0
    %v161 = vrcp.pop %v160
    %v162 = vmul.f32 1.0, %v161
    %v163 = vtanh.pop %v153
    %v164 = vmul.f32 %v162, %v163
    %165 = vst [vmem:[#allocation7] sm:$0xff] %v164
    %166 = vst [vmem:[#allocation7 + $0x8] sm:$0xff] %v153
    // Predicated region
    $region22: #{leaf_module_pallas.1} parent=1 // pred_check
      _
    $region23: #{leaf_module_pallas.1} parent=1 // pred_check_branch
      %168 = sbr.rel (0) target = $region25
    $region24: #{leaf_module_pallas.1} parent=1 // pred_region
      %s170 = ssub.s32 256, 256
      %171 = vsyncadd [#allocation4], %s170
      %s173 = sshll.u32 [#allocation7], 4
      %s174 = int_to_ptr.vmem [resolvable:$true] %s173
      %176 = dma.vmem_to_hbm [thread:$0]  %s174, 256, %s3, [#allocation4]
    $region25: #{leaf_module_pallas.1} parent=1 // pred_fallthru
      _
    // Predicated region
    $region26: #{leaf_module_pallas.1} parent=1 // pred_check
      _
    $region27: #{leaf_module_pallas.1} parent=1 // pred_check_branch
      %178 = sbr.rel (0) target = $region29
    $region28: #{leaf_module_pallas.1} parent=1 // pred_region
      %179 = dma.done [#allocation4], 256
    $region29: #{leaf_module_pallas.1} parent=1 // pred_fallthru
      _
    %180 = vsyncpa [#allocation3], 1
    %181 = vsyncpa [#allocation6], 1
    %182 = vsyncpa [#allocation4], 1

</llo_original>
